<compile_context>
chip_gen: v7x
topology: tpu7x:2x2x1
jax: 0.10.0
libtpu: 0.0.40
codegen_flags: <defaults>
</compile_context>

<pallas_src>
import jax
import jax.numpy as jnp
from jax.experimental import pallas as pl
from jax.experimental.pallas import tpu as pltpu


def _round_up(v, m):
    return -(-v // m) * m


def ffn3_kernel(x_ref, w1_ref, b1_ref, w2_ref, b2_ref, o_ref):
    x = x_ref[...]                                   # (tb, dim*n)  lane-dense
    # Layer 1 (block-diagonal packed): one MXU matmul, f32 accumulation.
    h = jnp.dot(x, w1_ref[...], preferred_element_type=jnp.float32) + b1_ref[...]
    # sigmoid(z) = 0.5*tanh(0.5 z)+0.5 : single EUP transcendental, no divide.
    h = 0.5 * jnp.tanh(0.5 * h) + 0.5
    # Layer 2 (block-diagonal packed): one small MXU matmul (MXU has huge slack).
    y = jnp.dot(h.astype(w2_ref.dtype), w2_ref[...],
                preferred_element_type=jnp.float32) + b2_ref[...]
    o_ref[...] = (y * y * y).astype(o_ref.dtype)     # x ** 3


def prepare_params(w1, b1, w2, b2, *, pack_n=8, matmul_dtype=jnp.float32):
    """One-time parameter prep (call at init, NOT per forward).

    w1: (dim, 5) = ffn1.weight.T    b1: (5,)   = ffn1.bias
    w2: (5, dim) = ffn2.weight.T    b2: (dim,) = ffn2.bias

    Builds lane-dense block-diagonal weights so `pack_n` original rows of x are
    processed as one packed row of width dim*pack_n (a multiple of 128 lanes):
        x_packed @ W1_bd  ==  the per-row x @ W1 results laid out side by side.
    """
    w1 = jnp.asarray(w1, matmul_dtype)
    w2 = jnp.asarray(w2, matmul_dtype)
    b1 = jnp.asarray(b1, jnp.float32)
    b2 = jnp.asarray(b2, jnp.float32)
    dim, hidden = w1.shape
    n = pack_n
    eye = jnp.eye(n, dtype=matmul_dtype)
    w1_bd = jnp.kron(eye, w1)                               # (dim*n, hidden*n)
    w2_bd = jnp.kron(eye, w2)                               # (hidden*n, dim*n)
    b1_row = jnp.tile(b1, n).reshape(1, hidden * n)
    b2_row = jnp.tile(b2, n).reshape(1, dim * n)
    return dict(w1_bd=w1_bd, b1=b1_row, w2_bd=w2_bd, b2=b2_row,
                pack_n=n, dim=dim, hidden=hidden)


def _vmem_config():
    """(vmem_limit_bytes, streamed-buffer budget), sized per chip when possible."""
    limit = 40 * 1024 * 1024                 # safe fallback for v7x's 64 MiB VMEM
    try:
        cap = int(pltpu.get_tpu_info().vmem_capacity_bytes)
        limit = min(int(cap * 3 // 4), 100 * 1024 * 1024)   # v5e/v6e: up to ~96 MB
    except Exception:
        pass
    budget = int(limit * 3 // 4)             # x + out, double-buffered by BlockSpec
    return limit, budget


def ffn3_forward(x, t, params, *, vmem_budget_bytes=None):
    """x: (B, dim). `t` kept for parity with the PyTorch signature (unused)."""
    del t
    n = params["pack_n"]
    dim = params["dim"]
    B, d = x.shape
    assert d == dim
    dim_p = dim * n
    out_dtype = x.dtype

    vmem_limit, budget = _vmem_config()
    if vmem_budget_bytes is not None:
        budget = vmem_budget_bytes

    # Packed-row count: each packed row carries `n` original rows (lane-dense).
    rows = _round_up(B, n) // n

    itemsize = jnp.dtype(x.dtype).itemsize
    sublane = 8 if itemsize == 4 else 16
    # Per packed row: x block + out block, each double-buffered by BlockSpec.
    bytes_per_row = 2 * 2 * dim_p * itemsize

    if rows <= sublane:
        tb = rows                                            # full-extent block
    else:
        tb_budget = max(sublane, (budget // bytes_per_row) // sublane * sublane)
        # v7x: keep >= 2 grid steps so both TensorCores get work.
        tb_split = max(sublane, _round_up(_round_up(rows, 2) // 2, sublane))
        tb = min(tb_budget, tb_split)

    rows_p = _round_up(rows, tb)
    b_pad = rows_p * n
    if b_pad != B:
        # Pad wrapper-side: no ragged / masked last tile; pad rows are finite
        # through sigmoid/cube and sliced off below.
        x = jnp.pad(x, ((0, b_pad - B), (0, 0)))
    xp = x.reshape(rows_p, dim_p)                            # free: row-major packing

    grid = (rows_p // tb,)
    const = lambda i: (0, 0)   # weights/biases: same block every step -> VMEM-resident

    out = pl.pallas_call(
        ffn3_kernel,
        out_shape=jax.ShapeDtypeStruct((rows_p, dim_p), out_dtype),
        grid=grid,
        in_specs=[
            pl.BlockSpec((tb, dim_p), lambda i: (i, 0)),     # x: streamed over batch
            pl.BlockSpec(params["w1_bd"].shape, const),      # W1 (block-diagonal)
            pl.BlockSpec(params["b1"].shape, const),         # b1 (tiled row)
            pl.BlockSpec(params["w2_bd"].shape, const),      # W2 (block-diagonal)
            pl.BlockSpec(params["b2"].shape, const),         # b2 (tiled row)
        ],
        out_specs=pl.BlockSpec((tb, dim_p), lambda i: (i, 0)),
        compiler_params=pltpu.CompilerParams(
            dimension_semantics=("parallel",),               # v7x: shard batch over 2 TCs
            vmem_limit_bytes=vmem_limit,
        ),
    )(xp, params["w1_bd"], params["b1"], params["w2_bd"], params["b2"])

    return out.reshape(b_pad, dim)[:B]


def _reference(x, w1, b1, w2, b2):
    h = jax.nn.sigmoid(x @ w1 + b1)
    y = h @ w2 + b2
    return y ** 3


if __name__ == "__main__":
    B, dim, H = 10, 32, 5                     # B not a multiple of pack_n: exercises padding
    key = jax.random.PRNGKey(0)
    kx, kt, k1, k2, k3, k4 = jax.random.split(key, 6)

    x = jax.random.normal(kx, (B, dim), dtype=jnp.float32)
    t = jax.random.normal(kt, (B,), dtype=jnp.float32)   # unused by forward

    # Deterministic "PyTorch-style" uniform(-1/sqrt(fan_in), 1/sqrt(fan_in)) init.
    bnd1 = 1.0 / jnp.sqrt(dim)
    bnd2 = 1.0 / jnp.sqrt(H)
    w1 = jax.random.uniform(k1, (dim, H), jnp.float32, -bnd1, bnd1)   # ffn1.weight.T
    b1 = jax.random.uniform(k2, (H,), jnp.float32, -bnd1, bnd1)       # ffn1.bias
    w2 = jax.random.uniform(k3, (H, dim), jnp.float32, -bnd2, bnd2)   # ffn2.weight.T
    b2 = jax.random.uniform(k4, (dim,), jnp.float32, -bnd2, bnd2)     # ffn2.bias

    # One-time parameter preparation (outside the per-call hot path).
    params = prepare_params(w1, b1, w2, b2, pack_n=8)

    out = ffn3_forward(x, t, params)
    out = jax.block_until_ready(out)

    ref = _reference(x, w1, b1, w2, b2)
    assert out.shape == (B, dim)
    assert jnp.allclose(out, ref, atol=2e-5, rtol=2e-5), "mismatch vs JAX reference"

    print("KERNEL_OK")
</pallas_src>

<mosaic_0001>
module attributes {stable_mosaic.version = 11 : i64} {
  func.func @ffn3_kernel(%arg0: i32, %arg1: memref<2x256xf32, #tpu.memory_space<vmem>>, %arg2: memref<256x40xf32, #tpu.memory_space<vmem>>, %arg3: memref<1x40xf32, #tpu.memory_space<vmem>>, %arg4: memref<40x256xf32, #tpu.memory_space<vmem>>, %arg5: memref<1x256xf32, #tpu.memory_space<vmem>>, %arg6: memref<2x256xf32, #tpu.memory_space<vmem>>) attributes {dimension_semantics = [#tpu.dimension_semantics<parallel>], iteration_bounds = array<i64: 1>, scalar_prefetch = 0 : i64, scratch_operands = 0 : i64, tpu.core_type = #tpu.core_type<tc>, window_params = [{transform_indices = @transform_0, window_bounds = array<i64: 2, 256>}, {pipeline_mode = #tpu.pipeline_mode<synchronous>, transform_indices = @transform_1, window_bounds = array<i64: 256, 40>}, {pipeline_mode = #tpu.pipeline_mode<synchronous>, transform_indices = @transform_2, window_bounds = array<i64: 1, 40>}, {pipeline_mode = #tpu.pipeline_mode<synchronous>, transform_indices = @transform_3, window_bounds = array<i64: 40, 256>}, {pipeline_mode = #tpu.pipeline_mode<synchronous>, transform_indices = @transform_4, window_bounds = array<i64: 1, 256>}, {transform_indices = @transform_5, window_bounds = array<i64: 2, 256>}]} {
    %c0 = arith.constant 0 : index
    %c0_0 = arith.constant 0 : index
    %0 = vector.load %arg1[%c0, %c0_0] : memref<2x256xf32, #tpu.memory_space<vmem>>, vector<2x256xf32>
    %c0_1 = arith.constant 0 : index
    %c0_2 = arith.constant 0 : index
    %1 = vector.load %arg2[%c0_1, %c0_2] : memref<256x40xf32, #tpu.memory_space<vmem>>, vector<256x40xf32>
    %cst = arith.constant dense<0.000000e+00> : vector<2x40xf32>
    %2 = tpu.matmul %0, %1, %cst {dimension_numbers = #tpu.dot_dimension_numbers<[1], [0], [0], [1], [0, 0, 1, 1], [], []>} : vector<2x256xf32>, vector<256x40xf32>, vector<2x40xf32> -> vector<2x40xf32>
    %c0_3 = arith.constant 0 : index
    %c0_4 = arith.constant 0 : index
    %3 = vector.load %arg3[%c0_3, %c0_4] : memref<1x40xf32, #tpu.memory_space<vmem>>, vector<1x40xf32>
    %4 = vector.broadcast %3 : vector<1x40xf32> to vector<2x40xf32>
    %5 = arith.addf %2, %4 : vector<2x40xf32>
    %cst_5 = arith.constant 5.000000e-01 : f32
    %6 = vector.broadcast %cst_5 : f32 to vector<2x40xf32>
    %7 = arith.mulf %6, %5 : vector<2x40xf32>
    %8 = math.tanh %7 : vector<2x40xf32>
    %cst_6 = arith.constant 5.000000e-01 : f32
    %9 = vector.broadcast %cst_6 : f32 to vector<2x40xf32>
    %10 = arith.mulf %9, %8 : vector<2x40xf32>
    %cst_7 = arith.constant 5.000000e-01 : f32
    %11 = vector.broadcast %cst_7 : f32 to vector<2x40xf32>
    %12 = arith.addf %10, %11 : vector<2x40xf32>
    %c0_8 = arith.constant 0 : index
    %c0_9 = arith.constant 0 : index
    %13 = vector.load %arg4[%c0_8, %c0_9] : memref<40x256xf32, #tpu.memory_space<vmem>>, vector<40x256xf32>
    %cst_10 = arith.constant dense<0.000000e+00> : vector<2x256xf32>
    %14 = tpu.matmul %12, %13, %cst_10 {dimension_numbers = #tpu.dot_dimension_numbers<[1], [0], [0], [1], [0, 0, 1, 1], [], []>} : vector<2x40xf32>, vector<40x256xf32>, vector<2x256xf32> -> vector<2x256xf32>
    %c0_11 = arith.constant 0 : index
    %c0_12 = arith.constant 0 : index
    %15 = vector.load %arg5[%c0_11, %c0_12] : memref<1x256xf32, #tpu.memory_space<vmem>>, vector<1x256xf32>
    %16 = vector.broadcast %15 : vector<1x256xf32> to vector<2x256xf32>
    %17 = arith.addf %14, %16 : vector<2x256xf32>
    %18 = arith.mulf %17, %17 : vector<2x256xf32>
    %19 = arith.mulf %18, %17 : vector<2x256xf32>
    %c0_13 = arith.constant 0 : index
    %c0_14 = arith.constant 0 : index
    %20 = vector.load %arg6[%c0_13, %c0_14] : memref<2x256xf32, #tpu.memory_space<vmem>>, vector<2x256xf32>
    tpu.vector_store %arg6[%c0_13, %c0_14], %19 {strides = array<i32>} : memref<2x256xf32, #tpu.memory_space<vmem>>, vector<2x256xf32>,
    return
  }
  func.func @transform_0(%arg0: i32) -> (i32, i32) {
    %c0_i32 = arith.constant 0 : i32
    %c0_i32_0 = arith.constant 0 : i32
    return %arg0, %c0_i32 : i32, i32
  }
  func.func @transform_1(%arg0: i32) -> (i32, i32) {
    %c0_i32 = arith.constant 0 : i32
    %c0_i32_0 = arith.constant 0 : i32
    %c0_i32_1 = arith.constant 0 : i32
    return %c0_i32, %c0_i32_0 : i32, i32
  }
  func.func @transform_2(%arg0: i32) -> (i32, i32) {
    %c0_i32 = arith.constant 0 : i32
    %c0_i32_0 = arith.constant 0 : i32
    %c0_i32_1 = arith.constant 0 : i32
    return %c0_i32, %c0_i32_0 : i32, i32
  }
  func.func @transform_3(%arg0: i32) -> (i32, i32) {
    %c0_i32 = arith.constant 0 : i32
    %c0_i32_0 = arith.constant 0 : i32
    %c0_i32_1 = arith.constant 0 : i32
    return %c0_i32, %c0_i32_0 : i32, i32
  }
  func.func @transform_4(%arg0: i32) -> (i32, i32) {
    %c0_i32 = arith.constant 0 : i32
    %c0_i32_0 = arith.constant 0 : i32
    %c0_i32_1 = arith.constant 0 : i32
    return %c0_i32, %c0_i32_0 : i32, i32
  }
  func.func @transform_5(%arg0: i32) -> (i32, i32) {
    %c0_i32 = arith.constant 0 : i32
    %c0_i32_0 = arith.constant 0 : i32
    return %arg0, %c0_i32 : i32, i32
  }
}

</mosaic_0001>

<llo_original>
// kernel: tpu_custom_call.1
$region0: #{tpu_custom_call.1}
  #allocation0 [shape = 'u32[]', space=smem, size = 0x4, offset = 0x4, fixed_abs, tag = 'smem constant byte address 0x4 - core index']
  #allocation1 [shape = 'u32[144,128]{1,0:T(1,128)}', space=vmem, size = 0x12000, scoped, tag = 'internal scratch']
  %s0 = inlined_call_operand.vmem [shape: f32[2,256], index: 0, kind: input, shape index: {}]
  %s1 = inlined_call_operand.vmem [shape: f32[256,40], index: 1, kind: input, shape index: {}]
  %s2 = inlined_call_operand.vmem [shape: f32[1,40], index: 2, kind: input, shape index: {}]
  %s3 = inlined_call_operand.vmem [shape: f32[40,256], index: 3, kind: input, shape index: {}]
  %s4 = inlined_call_operand.vmem [shape: f32[1,256], index: 4, kind: input, shape index: {}]
  %s5 = inlined_call_operand.hbm [shape: f32[2,256], index: 5, kind: output, shape index: {}]
  %s6 = sld [smem:[#allocation0]]
  $region30: #{tpu_custom_call.1} parent=0
    _
  %s8 = ssub.s32 1, %s6
  %s9 = scalar_select 0, %s8, %s6
  $region1: #{tpu_custom_call.1} parent=0
    #allocation2 [shape = 'u8[2048]{0}', space=vmem, size = 0x800, scoped, tag = 'output window, operand 0, single buffered']
    #allocation3 [shape = 's32[1]{0}', space=sflag, size = 0x4, scoped, tag = 'scoped memory for tpu_custom_call.1']
    %10 = vsyncpa [#allocation3], 0
    // Predicated region
    $region2: #{tpu_custom_call.1} parent=1 // pred_check
      _
    $region3: #{tpu_custom_call.1} parent=1 // pred_check_branch
      %12 = sbr.rel (0) target = $region5
    $region4: #{tpu_custom_call.1} parent=1 // pred_region
      _
    $region5: #{tpu_custom_call.1} parent=1 // pred_fallthru
      _
    // Predicated region
    $region6: #{tpu_custom_call.1} parent=1 // pred_check
      _
    $region7: #{tpu_custom_call.1} parent=1 // pred_check_branch
      %14 = sbr.rel (0) target = $region9
    $region8: #{tpu_custom_call.1} parent=1 // pred_region
      _
    $region9: #{tpu_custom_call.1} parent=1 // pred_fallthru
      _
    // Predicated region
    $region10: #{tpu_custom_call.1} parent=1 // pred_check
      _
    $region11: #{tpu_custom_call.1} parent=1 // pred_check_branch
      %16 = sbr.rel (0) target = $region13
    $region12: #{tpu_custom_call.1} parent=1 // pred_region
      _
    $region13: #{tpu_custom_call.1} parent=1 // pred_fallthru
      _
    // Predicated region
    $region14: #{tpu_custom_call.1} parent=1 // pred_check
      _
    $region15: #{tpu_custom_call.1} parent=1 // pred_check_branch
      %18 = sbr.rel (0) target = $region17
    $region16: #{tpu_custom_call.1} parent=1 // pred_region
      _
    $region17: #{tpu_custom_call.1} parent=1 // pred_fallthru
      _
    // Predicated region
    $region18: #{tpu_custom_call.1} parent=1 // pred_check
      _
    $region19: #{tpu_custom_call.1} parent=1 // pred_check_branch
      %20 = sbr.rel (0) target = $region21
    $region20: #{tpu_custom_call.1} parent=1 // pred_region
      _
    $region21: #{tpu_custom_call.1} parent=1 // pred_fallthru
      _
    %v21 = vld [vmem:[%s0] sm:$0xf]
    %v22 = vld [vmem:[%s1] sm:$0xff]
    %v23 = vld [vmem:[%s1 + $0x8] sm:$0xff]
    %v24 = vld [vmem:[%s1 + $0x10] sm:$0xff]
    %v25 = vld [vmem:[%s1 + $0x18] sm:$0xff]
    %v26 = vld [vmem:[%s1 + $0x20] sm:$0xff]
    %v27 = vld [vmem:[%s1 + $0x28] sm:$0xff]
    %v28 = vld [vmem:[%s1 + $0x30] sm:$0xff]
    %v29 = vld [vmem:[%s1 + $0x38] sm:$0xff]
    %v30 = vld [vmem:[%s1 + $0x40] sm:$0xff]
    %v31 = vld [vmem:[%s1 + $0x48] sm:$0xff]
    %v32 = vld [vmem:[%s1 + $0x50] sm:$0xff]
    %v33 = vld [vmem:[%s1 + $0x58] sm:$0xff]
    %v34 = vld [vmem:[%s1 + $0x60] sm:$0xff]
    %v35 = vld [vmem:[%s1 + $0x68] sm:$0xff]
    %v36 = vld [vmem:[%s1 + $0x70] sm:$0xff]
    %v37 = vld [vmem:[%s1 + $0x78] sm:$0xff]
    %v38 = vld [vmem:[%s1 + $0x80] sm:$0xff]
    %v39 = vld [vmem:[%s1 + $0x88] sm:$0xff]
    %v40 = vld [vmem:[%s1 + $0x90] sm:$0xff]
    %v41 = vld [vmem:[%s1 + $0x98] sm:$0xff]
    %v42 = vld [vmem:[%s1 + $0xa0] sm:$0xff]
    %v43 = vld [vmem:[%s1 + $0xa8] sm:$0xff]
    %v44 = vld [vmem:[%s1 + $0xb0] sm:$0xff]
    %v45 = vld [vmem:[%s1 + $0xb8] sm:$0xff]
    %v46 = vld [vmem:[%s1 + $0xc0] sm:$0xff]
    %v47 = vld [vmem:[%s1 + $0xc8] sm:$0xff]
    %v48 = vld [vmem:[%s1 + $0xd0] sm:$0xff]
    %v49 = vld [vmem:[%s1 + $0xd8] sm:$0xff]
    %v50 = vld [vmem:[%s1 + $0xe0] sm:$0xff]
    %v51 = vld [vmem:[%s1 + $0xe8] sm:$0xff]
    %v52 = vld [vmem:[%s1 + $0xf0] sm:$0xff]
    %v53 = vld [vmem:[%s1 + $0xf8] sm:$0xff]
    %v54 = vld [vmem:[%s2] sm:$0x1]
    %v56 = vlaneseq
    %v57 = vshrl.u32 %v56, 7
    %v58 = vsub.s32 0, %v57
    %v59 = vrot.slane %v54, %v58
    %v63 = vunpack.c.l.s4 1983009808
    %v64 = vunpack.c.0.s8 %v63
    %v65 = vlaneseq
    %v66 = vshrl.u32 %v65, 7
    %v67 = vsub.s32 %v64, %v66
    %v68 = vrot.slane %v21, %v67
    %v69 = vcombine.high %v68, %v68
    %72 = vmatprep.subr.mxu0 0.0
    %73 = vmatpush1.msra.mxu0 %v22
    %74 = vmatprep.subr.mxu0 0.0
    %75 = vmatpush1.msra.mxu0 %v23
    %76 = vmatprep.subr.mxu0 0.0
    %77 = vmatpush1.msra.mxu0 %v24
    %78 = vmatprep.subr.mxu0 0.0
    %79 = vmatpush1.msra.mxu0 %v25
    %80 = vmatprep.subr.mxu0 0.0
    %81 = vmatpush1.msra.mxu0 %v26
    %82 = vmatprep.subr.mxu0 0.0
    %83 = vmatpush1.msra.mxu0 %v27
    %84 = vmatprep.subr.mxu0 0.0
    %85 = vmatpush1.msra.mxu0 %v28
    %86 = vmatprep.subr.mxu0 0.0
    %87 = vmatpush1.msra.mxu0 %v29
    %88 = vmatprep.subr.mxu0 0.0
    %89 = vmatpush1.msra.mxu0 %v30
    %90 = vmatprep.subr.mxu0 0.0
    %91 = vmatpush1.msra.mxu0 %v31
    %92 = vmatprep.subr.mxu0 0.0
    %93 = vmatpush1.msra.mxu0 %v32
    %94 = vmatprep.subr.mxu0 0.0
    %95 = vmatpush1.msra.mxu0 %v33
    %96 = vmatprep.subr.mxu0 0.0
    %97 = vmatpush1.msra.mxu0 %v34
    %98 = vmatprep.subr.mxu0 0.0
    %99 = vmatpush1.msra.mxu0 %v35
    %100 = vmatprep.subr.mxu0 0.0
    %101 = vmatpush1.msra.mxu0 %v36
    %102 = vmatprep.subr.mxu0 0.0
    %103 = vmatpush1.msra.mxu0 %v37
    %104 = vmatprep.subr.mxu0 0.0
    %105 = vmatpush1.msra.mxu0 %v38
    %106 = vmatprep.subr.mxu0 0.0
    %107 = vmatpush1.msra.mxu0 %v39
    %108 = vmatprep.subr.mxu0 0.0
    %109 = vmatpush1.msra.mxu0 %v40
    %110 = vmatprep.subr.mxu0 0.0
    %111 = vmatpush1.msra.mxu0 %v41
    %112 = vmatprep.subr.mxu0 0.0
    %113 = vmatpush1.msra.mxu0 %v42
    %114 = vmatprep.subr.mxu0 0.0
    %115 = vmatpush1.msra.mxu0 %v43
    %116 = vmatprep.subr.mxu0 0.0
    %117 = vmatpush1.msra.mxu0 %v44
    %118 = vmatprep.subr.mxu0 0.0
    %119 = vmatpush1.msra.mxu0 %v45
    %120 = vmatprep.subr.mxu0 0.0
    %121 = vmatpush1.msra.mxu0 %v46
    %122 = vmatprep.subr.mxu0 0.0
    %123 = vmatpush1.msra.mxu0 %v47
    %124 = vmatprep.subr.mxu0 0.0
    %125 = vmatpush1.msra.mxu0 %v48
    %126 = vmatprep.subr.mxu0 0.0
    %127 = vmatpush1.msra.mxu0 %v49
    %128 = vmatprep.subr.mxu0 0.0
    %129 = vmatpush1.msra.mxu0 %v50
    %130 = vmatprep.subr.mxu0 0.0
    %131 = vmatpush1.msra.mxu0 %v51
    %132 = vmatprep.subr.mxu0 0.0
    %133 = vmatpush1.msra.mxu0 %v52
    %134 = vmatprep.subr.mxu0 0.0
    %135 = vmatpush1.msra.mxu0 %v53
    %136 = vmatprep.mubr.f32.mxu0 %v69
    %137 = vmatmul.mubr.f32.gmra.mrb[0].mxu0 %v68
    %v138 = vpop.f32.mrb[0].mxu0
    %v139 = vadd.f32 %v59, %v138
    %v140 = vpop.f32.mrb[0].mxu0
    %141 = vdwg.mxu0
    %v142 = vmul.f32 %v139, 0.5
    %v143 = vtanh.pop %v142
    %v144 = vmul.f32 %v143, 0.5
    %v145 = vadd.f32 %v144, 0.5
    %v146 = vld [vmem:[%s3] sm:$0xff]
    %v147 = vld [vmem:[%s3 + $0x8] sm:$0xff]
    %v148 = vld [vmem:[%s3 + $0x10] sm:$0xff]
    %v149 = vld [vmem:[%s3 + $0x18] sm:$0xff]
    %v150 = vld [vmem:[%s3 + $0x20] sm:$0xff]
    %v151 = vld [vmem:[%s3 + $0x28] sm:$0xff]
    %v152 = vld [vmem:[%s3 + $0x30] sm:$0xff]
    %v153 = vld [vmem:[%s3 + $0x38] sm:$0xff]
    %v154 = vld [vmem:[%s3 + $0x40] sm:$0xff]
    %v155 = vld [vmem:[%s3 + $0x48] sm:$0xff]
    %v156 = vld [vmem:[%s4] sm:$0x3]
    %v158 = vlaneseq
    %v159 = vshrl.u32 %v158, 7
    %v160 = vsub.s32 0, %v159
    %v161 = vrot.slane %v156, %v160
    %v162 = vlaneseq
    %v163 = vshrl.u32 %v162, 7
    %v164 = vsub.s32 1, %v163
    %v165 = vrot.slane %v156, %v164
    %vm168 = vcmask 326656
    %v170 = vsel %vm168, %v145, 0
    %172 = vmatprep.subr.mxu0 %v147
    %173 = vmatpush1.msra.mxu0 %v146
    %174 = vmatprep.subr.mxu0 %v149
    %175 = vmatpush1.msra.mxu0 %v148
    %176 = vmatprep.subr.mxu0 %v151
    %177 = vmatpush1.msra.mxu0 %v150
    %178 = vmatprep.subr.mxu0 %v153
    %179 = vmatpush1.msra.mxu0 %v152
    %180 = vmatprep.subr.mxu0 %v155
    %181 = vmatpush1.msra.mxu0 %v154
    %182 = vmatprep.subr.mxu0 0.0
    %183 = vmatpush1.msra.mxu0 0.0
    %184 = vmatprep.subr.mxu0 0.0
    %185 = vmatpush1.msra.mxu0 0.0
    %186 = vmatprep.subr.mxu0 0.0
    %187 = vmatpush1.msra.mxu0 0.0
    %188 = vmatprep.subr.mxu0 0.0
    %189 = vmatpush1.msra.mxu0 0.0
    %190 = vmatprep.subr.mxu0 0.0
    %191 = vmatpush1.msra.mxu0 0.0
    %192 = vmatprep.subr.mxu0 0.0
    %193 = vmatpush1.msra.mxu0 0.0
    %194 = vmatprep.subr.mxu0 0.0
    %195 = vmatpush1.msra.mxu0 0.0
    %196 = vmatprep.subr.mxu0 0.0
    %197 = vmatpush1.msra.mxu0 0.0
    %198 = vmatprep.subr.mxu0 0.0
    %199 = vmatpush1.msra.mxu0 0.0
    %200 = vmatprep.subr.mxu0 0.0
    %201 = vmatpush1.msra.mxu0 0.0
    %202 = vmatprep.subr.mxu0 0.0
    %203 = vmatpush1.msra.mxu0 0.0
    %204 = vmatprep.subr.mxu0 0.0
    %205 = vmatpush1.msra.mxu0 0.0
    %206 = vmatprep.subr.mxu0 0.0
    %207 = vmatpush1.msra.mxu0 0.0
    %208 = vmatprep.subr.mxu0 0.0
    %209 = vmatpush1.msra.mxu0 0.0
    %210 = vmatprep.subr.mxu0 0.0
    %211 = vmatpush1.msra.mxu0 0.0
    %212 = vmatprep.subr.mxu0 0.0
    %213 = vmatpush1.msra.mxu0 0.0
    %214 = vmatprep.subr.mxu0 0.0
    %215 = vmatpush1.msra.mxu0 0.0
    %216 = vmatprep.subr.mxu0 0.0
    %217 = vmatpush1.msra.mxu0 0.0
    %218 = vmatprep.subr.mxu0 0.0
    %219 = vmatpush1.msra.mxu0 0.0
    %220 = vmatprep.subr.mxu0 0.0
    %221 = vmatpush1.msra.mxu0 0.0
    %222 = vmatprep.subr.mxu0 0.0
    %223 = vmatpush1.msra.mxu0 0.0
    %224 = vmatprep.subr.mxu0 0.0
    %225 = vmatpush1.msra.mxu0 0.0
    %226 = vmatprep.subr.mxu0 0.0
    %227 = vmatpush1.msra.mxu0 0.0
    %228 = vmatprep.subr.mxu0 0.0
    %229 = vmatpush1.msra.mxu0 0.0
    %230 = vmatprep.subr.mxu0 0.0
    %231 = vmatpush1.msra.mxu0 0.0
    %232 = vmatprep.subr.mxu0 0.0
    %233 = vmatpush1.msra.mxu0 0.0
    %234 = vmatprep.subr.mxu0 0.0
    %235 = vmatpush1.msra.mxu0 0.0
    %236 = vmatprep.mubr.f32.mxu0 0.0
    %237 = vmatmul.mubr.f32.gmra.mrb[0].mxu0 %v170
    %v238 = vpop.f32.mrb[0].mxu0
    %v239 = vadd.f32 %v161, %v238
    %v240 = vpop.f32.mrb[0].mxu0
    %v241 = vadd.f32 %v165, %v240
    %242 = vdwg.mxu0
    %v243 = vmul.f32 %v239, %v239
    %v244 = vmul.f32 %v241, %v241
    %v245 = vmul.f32 %v243, %v239
    %v246 = vmul.f32 %v244, %v241
    %v249 = vcombine.low %v245, %v246
    %v251 = vunpack.c.l.s4 1983009808
    %v252 = vunpack.c.0.s8 %v251
    %v253 = vlaneseq
    %v254 = vshrl.u32 %v253, 7
    %v255 = vsub.s32 %v252, %v254
    %v256 = vrot.slane %v249, %v255
    %258 = vst [vmem:[#allocation2] sm:$0xf] %v256
    // Predicated region
    $region22: #{tpu_custom_call.1} parent=1 // pred_check
      _
    $region23: #{tpu_custom_call.1} parent=1 // pred_check_branch
      %260 = sbr.rel (0) target = $region25
    $region24: #{tpu_custom_call.1} parent=1 // pred_region
      %s262 = ssub.s32 64, 64
      %263 = vsyncadd [#allocation3], %s262
      %s265 = sshll.u32 [#allocation2], 4
      %s266 = int_to_ptr.vmem [resolvable:$true] %s265
      %268 = dma.vmem_to_hbm [thread:$0]  %s266, 64, %s5, [#allocation3]
    $region25: #{tpu_custom_call.1} parent=1 // pred_fallthru
      _
    // Predicated region
    $region26: #{tpu_custom_call.1} parent=1 // pred_check
      _
    $region27: #{tpu_custom_call.1} parent=1 // pred_check_branch
      %270 = sbr.rel (0) target = $region29
    $region28: #{tpu_custom_call.1} parent=1 // pred_region
      %271 = dma.done [#allocation3], 64
    $region29: #{tpu_custom_call.1} parent=1 // pred_fallthru
      _
    %272 = vsyncpa [#allocation3], 1

</llo_original>
